<compile_context>
chip_gen: v7x
topology: tpu7x:2x2x1
jax: 0.10.0
libtpu: 0.0.40
codegen_flags: <defaults>
</compile_context>

<pallas_src>
import functools

import numpy as np
import jax
import jax.numpy as jnp
from jax.experimental import pallas as pl
from jax.experimental.pallas import tpu as pltpu


# ---------------------------------------------------------------------------
# Kernel 1: VMEM-resident embedding table (small vocab).
# ---------------------------------------------------------------------------
def _resident_pool_kernel(ids_ref,     # (TB, S) int32  token ids (-1 = padding)
                          scores_ref,  # (TB, S) f32    precomputed q-scores per token
                          emb_ref,     # (V, E)         resident embedding table
                          o_ref):      # (TB, E) f32    pooled embeddings
    TB, S = ids_ref.shape
    V = emb_ref.shape[0]

    ids = ids_ref[...]
    valid = ids != -1
    validf = valid.astype(jnp.float32)

    # masked softmax over the token axis (== softmax over valid tokens only)
    s = jnp.where(valid, scores_ref[...], jnp.float32(-1e30))
    m = jnp.max(s, axis=-1, keepdims=True)
    e = jnp.exp(s - m) * validf                          # exactly 0 on padding
    denom = jnp.maximum(jnp.sum(e, axis=-1, keepdims=True), jnp.float32(1e-30))
    p = e * pl.reciprocal(denom, approx=False)           # (TB, S)

    # Fold the attention weights onto vocab rows:
    #   t_hat[b] = sum_s p[b,s] * emb[id[b,s]] = (sum_s p[b,s]*onehot[b,s,:]) @ emb
    onehot = (jnp.maximum(ids, 0)[:, :, None] ==
              jax.lax.broadcasted_iota(jnp.int32, (TB, S, V), 2)).astype(jnp.float32)
    w = jnp.sum(onehot * p[:, :, None], axis=1)           # (TB, V)

    emb = emb_ref[...]
    o_ref[...] = jnp.dot(w.astype(emb.dtype), emb,         # (TB,V)@(V,E) on the MXU
                         preferred_element_type=jnp.float32)


# ---------------------------------------------------------------------------
# Kernel 2: embedding table in HBM, manual row gather double-buffered across
# grid steps (large vocab).
# ---------------------------------------------------------------------------
def _hbm_gather_pool_kernel(ids_smem,    # (Bp*S,) int32  SMEM (scalar prefetch, flat ids)
                            ids_ref,     # (TB, S) int32  this tile's ids (mask)
                            scores_ref,  # (TB, S) f32    precomputed q-scores
                            emb_hbm,     # (V, E)         embedding table, HBM (pl.ANY)
                            o_ref,       # (TB, E) f32    pooled embeddings
                            emb_buf,     # (2, TB*S, E)   VMEM scratch (double buffer)
                            sems):       # DMA semaphores, shape (2,)
    i = pl.program_id(0)
    n_tiles = pl.num_programs(0)
    TB, S = ids_ref.shape
    E = o_ref.shape[-1]
    n_tok = TB * S
    slot = i % 2

    def issue_tile(tile, to_slot):
        # fully unrolled (n_tok is a trace-time constant): lets the scheduler
        # overlap address math with descriptor issue.
        # TODO(synk): chunk issue/wait groups (and dedupe repeated ids) when
        # TB*S grows large enough to exceed the outstanding-DMA queue depth.
        base = tile * n_tok
        for t in range(n_tok):
            row = jnp.maximum(ids_smem[base + t], 0)   # clamp -1 padding; masked below
            pltpu.make_async_copy(emb_hbm.at[pl.ds(row, 1)],
                                  emb_buf.at[to_slot, pl.ds(t, 1)],
                                  sems.at[to_slot]).start()

    @pl.when(i == 0)
    def _():                       # prime the first tile
        issue_tile(0, 0)

    @pl.when(i + 1 < n_tiles)
    def _():                       # prefetch next tile while this one computes
        issue_tile(i + 1, 1 - slot)

    # One wait for this tile's whole gather: DMA semaphores count bytes, so a
    # single full-size descriptor wait replaces n_tok per-row waits.
    pltpu.make_async_copy(emb_buf.at[slot], emb_buf.at[slot], sems.at[slot]).wait()

    ids = ids_ref[...]
    valid = ids != -1
    validf = valid.astype(jnp.float32)
    s = jnp.where(valid, scores_ref[...], jnp.float32(-1e30))
    m = jnp.max(s, axis=-1, keepdims=True)
    e = jnp.exp(s - m) * validf
    denom = jnp.maximum(jnp.sum(e, axis=-1, keepdims=True), jnp.float32(1e-30))
    p = e * pl.reciprocal(denom, approx=False)            # (TB, S)

    emb3 = emb_buf[slot].astype(jnp.float32).reshape(TB, S, E)
    # Weighted token sum on the VPU/XLU (sublane reduce over S); a batched
    # M=1 MXU matmul would waste the systolic array here.
    o_ref[...] = jnp.sum(emb3 * p[:, :, None], axis=1)


# ---------------------------------------------------------------------------
# Wrapper
# ---------------------------------------------------------------------------
def _pick_tb(B):
    """Tile size: multiple of 8, <= 64, and >= 2 tiles when B allows (v7x 2 TCs)."""
    b8 = ((B + 7) // 8) * 8
    half = ((b8 // 2 + 7) // 8) * 8 if b8 >= 16 else b8
    return max(8, min(64, half))


def _mosaic_params(*, parallel, vmem_need_bytes):
    kwargs = {"dimension_semantics": (("parallel",) if parallel else ("arbitrary",))}
    if vmem_need_bytes > 12 * 1024 * 1024:
        # Raise the scoped-VMEM limit only when needed; stay well under v7x's
        # 64 MiB physical VMEM (v5e/v6e have 128 MiB).
        kwargs["vmem_limit_bytes"] = int(min(max(2 * vmem_need_bytes, 32 * 1024 * 1024),
                                             56 * 1024 * 1024))
    return pltpu.CompilerParams(**kwargs)


@functools.partial(jax.jit, static_argnames=("tb", "force_hbm_gather"))
def model2_forward(x_ids, embeddings, q_w, q_b, l_w, l_b, *,
                   tb=None, force_hbm_gather=False):
    """x_ids: (B, S) int32 token ids with -1 = padding. Returns (B, 2) float32.

    `q_b` is accepted for interface fidelity but is a mathematical no-op
    (softmax is invariant to a per-row constant shift).
    """
    del q_b
    B, S = x_ids.shape
    V, E = embeddings.shape
    x_ids = x_ids.astype(jnp.int32)

    if tb is None:
        tb = _pick_tb(B)
    Bp = ((B + tb - 1) // tb) * tb
    if Bp != B:
        x_ids_p = jnp.concatenate(
            [x_ids, jnp.full((Bp - B, S), -1, jnp.int32)], axis=0)
    else:
        x_ids_p = x_ids
    num_tiles = Bp // tb

    # Precompute per-vocab attention scores in XLA (q bias dropped), then
    # gather per token id.  This removes the E-wide score reduction from the
    # kernel entirely; invalid (-1) tokens are masked inside the kernel.
    score_vec = jnp.einsum("ve,e->v", embeddings,
                           q_w.reshape(-1).astype(embeddings.dtype),
                           preferred_element_type=jnp.float32)          # (V,)
    token_scores = jnp.take(score_vec, jnp.maximum(x_ids_p, 0),
                            axis=0).astype(jnp.float32)                 # (Bp, S)

    itemsize = jnp.dtype(embeddings.dtype).itemsize
    table_bytes = V * E * itemsize
    onehot_bytes = tb * S * V * 4
    use_resident = (not force_hbm_gather
                    and table_bytes <= (4 << 20)
                    and onehot_bytes <= (4 << 20))

    if use_resident:
        vmem_need = (2 * table_bytes + 4 * tb * S * 4 + 2 * tb * E * 4
                     + onehot_bytes + tb * V * 4)
        t_hat = pl.pallas_call(
            _resident_pool_kernel,
            out_shape=jax.ShapeDtypeStruct((Bp, E), jnp.float32),
            grid_spec=pltpu.PrefetchScalarGridSpec(
                num_scalar_prefetch=0,
                grid=(num_tiles,),
                in_specs=[
                    pl.BlockSpec((tb, S), lambda i: (i, 0)),   # ids
                    pl.BlockSpec((tb, S), lambda i: (i, 0)),   # precomputed scores
                    pl.BlockSpec((V, E), lambda i: (0, 0)),    # resident table
                ],
                out_specs=pl.BlockSpec((tb, E), lambda i: (i, 0)),
            ),
            compiler_params=_mosaic_params(parallel=True, vmem_need_bytes=vmem_need),
        )(x_ids_p, token_scores, embeddings)
    else:
        # TODO(synk): for very large Bp*S the flat-id scalar prefetch can blow
        # SMEM; DMA per-tile id blocks into an SMEM scratch instead.
        ids_flat = x_ids_p.reshape(-1)
        vmem_need = (2 * tb * S * E * itemsize + 4 * tb * S * 4
                     + 2 * tb * E * 4 + tb * S * E * 4)
        t_hat = pl.pallas_call(
            _hbm_gather_pool_kernel,
            out_shape=jax.ShapeDtypeStruct((Bp, E), jnp.float32),
            grid_spec=pltpu.PrefetchScalarGridSpec(
                num_scalar_prefetch=1,
                grid=(num_tiles,),
                in_specs=[
                    pl.BlockSpec((tb, S), lambda i, ids: (i, 0)),   # ids (mask)
                    pl.BlockSpec((tb, S), lambda i, ids: (i, 0)),   # precomputed scores
                    pl.BlockSpec(memory_space=pl.ANY),              # table stays in HBM
                ],
                out_specs=pl.BlockSpec((tb, E), lambda i, ids: (i, 0)),
                scratch_shapes=[
                    pltpu.VMEM((2, tb * S, E), embeddings.dtype),   # double-buffered rows
                    pltpu.SemaphoreType.DMA((2,)),
                ],
            ),
            # cross-step double buffering carries state -> sequential grid.
            compiler_params=_mosaic_params(parallel=False, vmem_need_bytes=vmem_need),
        )(ids_flat, x_ids_p, token_scores, embeddings)

    t_hat = t_hat[:B]
    # Tiny final Linear(E, 2) in plain XLA: keeps kernel stores lane-dense
    # (TB, 128) instead of 2-lane masked partial stores.
    return t_hat @ l_w.astype(jnp.float32).T + l_b.astype(jnp.float32)


# ---------------------------------------------------------------------------
# Reference (mirrors the PyTorch forward exactly)
# ---------------------------------------------------------------------------
def _reference(x_ids, embeddings, q_w, q_b, l_w, l_b):
    x = np.asarray(x_ids)
    emb = np.asarray(embeddings, np.float32)
    qw = np.asarray(q_w, np.float32)
    qb = np.asarray(q_b, np.float32)
    lw = np.asarray(l_w, np.float32)
    lb = np.asarray(l_b, np.float32)
    B, S = x.shape
    E = emb.shape[1]
    t_hat = np.zeros((B, E), np.float32)
    for i in range(B):
        tmp = np.stack([emb[x[i, j]] for j in range(S) if x[i, j] != -1], 0)
        s = tmp @ qw.T + qb
        p = np.exp(s - s.max(0, keepdims=True))
        p = p / p.sum(0, keepdims=True)
        t_hat[i] = (tmp * p).sum(0)
    return t_hat @ lw.T + lb


if __name__ == "__main__":
    V, E, B, S = 32, 128, 16, 8      # vocab, embeddings_size, batch, seq
    key = jax.random.PRNGKey(0)
    k1, k2, k3, k4, k5, k6 = jax.random.split(key, 6)

    embeddings = jax.random.normal(k1, (V, E), jnp.float32)
    q_w = jax.random.normal(k2, (1, E), jnp.float32) * 0.1   # nn.Linear(E, 1).weight
    q_b = jnp.full((1,), 0.05, jnp.float32)                  # nn.Linear(E, 1).bias
    l_w = jax.random.normal(k3, (2, E), jnp.float32) * 0.1   # nn.Linear(E, 2).weight
    l_b = jax.random.normal(k4, (2,), jnp.float32) * 0.1     # nn.Linear(E, 2).bias

    # token ids with -1 padding at the tail (first token always valid, matching
    # the assumption baked into the PyTorch loop)
    tok = jax.random.randint(k5, (B, S), 0, V, dtype=jnp.int32)
    lens = jax.random.randint(k6, (B, 1), 1, S + 1, dtype=jnp.int32)
    pos = jnp.arange(S, dtype=jnp.int32)[None, :]
    x_ids = jnp.where(pos < lens, tok, -1)

    ref = _reference(x_ids, embeddings, q_w, q_b, l_w, l_b)

    # Path 1: VMEM-resident table (the default for this 16 KiB table).
    out_res = jax.block_until_ready(
        model2_forward(x_ids, embeddings, q_w, q_b, l_w, l_b))
    np.testing.assert_allclose(np.asarray(out_res), ref, rtol=1e-4, atol=1e-4)

    # Path 2: HBM gather with cross-step double buffering (large-vocab path).
    out_hbm = jax.block_until_ready(
        model2_forward(x_ids, embeddings, q_w, q_b, l_w, l_b,
                       force_hbm_gather=True))
    np.testing.assert_allclose(np.asarray(out_hbm), ref, rtol=1e-4, atol=1e-4)

    print("KERNEL_OK")
</pallas_src>

<mosaic_0001>
module attributes {stable_mosaic.version = 11 : i64} {
  func.func @_resident_pool_kernel(%arg0: i32, %arg1: memref<8x8xi32, #tpu.memory_space<vmem>>, %arg2: memref<8x8xf32, #tpu.memory_space<vmem>>, %arg3: memref<32x128xf32, #tpu.memory_space<vmem>>, %arg4: memref<8x128xf32, #tpu.memory_space<vmem>>) attributes {dimension_semantics = [#tpu.dimension_semantics<parallel>], iteration_bounds = array<i64: 2>, scalar_prefetch = 0 : i64, scratch_operands = 0 : i64, tpu.core_type = #tpu.core_type<tc>, window_params = [{transform_indices = @transform_0, window_bounds = array<i64: 8, 8>}, {transform_indices = @transform_1, window_bounds = array<i64: 8, 8>}, {pipeline_mode = #tpu.pipeline_mode<synchronous>, transform_indices = @transform_2, window_bounds = array<i64: 32, 128>}, {transform_indices = @transform_3, window_bounds = array<i64: 8, 128>}]} {
    %c0 = arith.constant 0 : index
    %c0_0 = arith.constant 0 : index
    %0 = vector.load %arg1[%c0, %c0_0] : memref<8x8xi32, #tpu.memory_space<vmem>>, vector<8x8xi32>
    %c-1_i32 = arith.constant -1 : i32
    %1 = vector.broadcast %c-1_i32 : i32 to vector<8x8xi32>
    %2 = arith.cmpi ne, %0, %1 : vector<8x8xi32>
    %3 = arith.extui %2 : vector<8x8xi1> to vector<8x8xi32>
    %4 = arith.sitofp %3 : vector<8x8xi32> to vector<8x8xf32>
    %c0_1 = arith.constant 0 : index
    %c0_2 = arith.constant 0 : index
    %5 = vector.load %arg2[%c0_1, %c0_2] : memref<8x8xf32, #tpu.memory_space<vmem>>, vector<8x8xf32>
    %cst = arith.constant -1.000000e+30 : f32
    %6 = vector.broadcast %cst : f32 to vector<8x8xf32>
    %7 = arith.select %2, %5, %6 : vector<8x8xi1>, vector<8x8xf32>
    %cst_3 = arith.constant dense<0xFF800000> : vector<8xf32>
    %8 = vector.multi_reduction <maximumf>, %7, %cst_3 [1] : vector<8x8xf32> to vector<8xf32>
    %9 = vector.shape_cast %8 : vector<8xf32> to vector<8x1xf32>
    %10 = vector.broadcast %9 : vector<8x1xf32> to vector<8x8xf32>
    %11 = arith.subf %7, %10 : vector<8x8xf32>
    %12 = math.exp %11 : vector<8x8xf32>
    %13 = arith.mulf %12, %4 : vector<8x8xf32>
    %cst_4 = arith.constant dense<0.000000e+00> : vector<8xf32>
    %14 = vector.multi_reduction <add>, %13, %cst_4 [1] : vector<8x8xf32> to vector<8xf32>
    %15 = vector.shape_cast %14 : vector<8xf32> to vector<8x1xf32>
    %cst_5 = arith.constant 1.000000e-30 : f32
    %16 = vector.broadcast %cst_5 : f32 to vector<8x1xf32>
    %17 = arith.maximumf %15, %16 : vector<8x1xf32>
    %18 = tpu.reciprocal %17 : vector<8x1xf32> -> vector<8x1xf32>
    %19 = vector.broadcast %18 : vector<8x1xf32> to vector<8x8xf32>
    %20 = arith.mulf %13, %19 : vector<8x8xf32>
    %c0_i32 = arith.constant 0 : i32
    %21 = vector.broadcast %c0_i32 : i32 to vector<8x8xi32>
    %22 = arith.maxsi %0, %21 : vector<8x8xi32>
    %23 = vector.shape_cast %22 : vector<8x8xi32> to vector<8x8x1xi32>
    %24 = tpu.iota {dimensions = array<i32: 2>} : vector<8x8x32xi32>
    %25 = vector.broadcast %23 : vector<8x8x1xi32> to vector<8x8x32xi32>
    %26 = arith.cmpi eq, %25, %24 : vector<8x8x32xi32>
    %27 = arith.extui %26 : vector<8x8x32xi1> to vector<8x8x32xi32>
    %28 = arith.sitofp %27 : vector<8x8x32xi32> to vector<8x8x32xf32>
    %29 = vector.shape_cast %20 : vector<8x8xf32> to vector<8x8x1xf32>
    %30 = vector.broadcast %29 : vector<8x8x1xf32> to vector<8x8x32xf32>
    %31 = arith.mulf %28, %30 : vector<8x8x32xf32>
    %cst_6 = arith.constant dense<0.000000e+00> : vector<8x32xf32>
    %32 = vector.multi_reduction <add>, %31, %cst_6 [1] : vector<8x8x32xf32> to vector<8x32xf32>
    %c0_7 = arith.constant 0 : index
    %c0_8 = arith.constant 0 : index
    %33 = vector.load %arg3[%c0_7, %c0_8] : memref<32x128xf32, #tpu.memory_space<vmem>>, vector<32x128xf32>
    %cst_9 = arith.constant dense<0.000000e+00> : vector<8x128xf32>
    %34 = tpu.matmul %32, %33, %cst_9 {dimension_numbers = #tpu.dot_dimension_numbers<[1], [0], [0], [1], [0, 0, 1, 1], [], []>} : vector<8x32xf32>, vector<32x128xf32>, vector<8x128xf32> -> vector<8x128xf32>
    %c0_10 = arith.constant 0 : index
    %c0_11 = arith.constant 0 : index
    %35 = vector.load %arg4[%c0_10, %c0_11] : memref<8x128xf32, #tpu.memory_space<vmem>>, vector<8x128xf32>
    tpu.vector_store %arg4[%c0_10, %c0_11], %34 {strides = array<i32>} : memref<8x128xf32, #tpu.memory_space<vmem>>, vector<8x128xf32>,
    return
  }
  func.func @transform_0(%arg0: i32) -> (i32, i32) {
    %c0_i32 = arith.constant 0 : i32
    %c0_i32_0 = arith.constant 0 : i32
    return %arg0, %c0_i32 : i32, i32
  }
  func.func @transform_1(%arg0: i32) -> (i32, i32) {
    %c0_i32 = arith.constant 0 : i32
    %c0_i32_0 = arith.constant 0 : i32
    return %arg0, %c0_i32 : i32, i32
  }
  func.func @transform_2(%arg0: i32) -> (i32, i32) {
    %c0_i32 = arith.constant 0 : i32
    %c0_i32_0 = arith.constant 0 : i32
    %c0_i32_1 = arith.constant 0 : i32
    return %c0_i32, %c0_i32_0 : i32, i32
  }
  func.func @transform_3(%arg0: i32) -> (i32, i32) {
    %c0_i32 = arith.constant 0 : i32
    %c0_i32_0 = arith.constant 0 : i32
    return %arg0, %c0_i32 : i32, i32
  }
}

</mosaic_0001>

<llo_original>
// kernel: model2_forward.1
$region0: #{model2_forward.1}
  #allocation0 [shape = 'u32[]', space=smem, size = 0x4, offset = 0x4, fixed_abs, tag = 'smem constant byte address 0x4 - core index']
  #allocation1 [shape = 'u32[144,128]{1,0:T(1,128)}', space=vmem, size = 0x12000, scoped, tag = 'internal scratch']
  %s0 = inlined_call_operand.vmem [shape: s32[16,8], index: 0, kind: input, shape index: {}]
  %s1 = inlined_call_operand.vmem [shape: f32[16,8], index: 1, kind: input, shape index: {}]
  %s2 = inlined_call_operand.vmem [shape: f32[32,128], index: 2, kind: input, shape index: {}]
  %s3 = inlined_call_operand.vmem [shape: f32[16,128], index: 3, kind: output, shape index: {}]
  %s4 = sld [smem:[#allocation0]]
  $region45: #{model2_forward.1} parent=0
    _
  %s6 = ssub.s32 1, %s4
  %s7 = scalar_select 0, %s6, %s4
  loop: start=0, step=1, limit=4
  $region2: #{model2_forward.1} parent=0 // loop_pre_header
    _
  $region3: #{model2_forward.1} parent=0 // loop_header
    %s9 = sphi 0, %s13
    %p10 = scmp.ge.s32.totalorder %s9, 4
    %s19 = sphi 0, %s21
    %s22 = sphi 0, %s19
    %s23 = sphi 0, %s22
    %s39 = sphi 0, %s23
    %s45 = sphi 0, %s47
    %s48 = sphi 0, %s45
    %s49 = sphi 0, %s48
    %s65 = sphi 0, %s49
    %s69 = sphi 0, %s69
    %s71 = sphi 0, %s69
    %s72 = sphi 0, %s71
    %s86 = sphi 0, %s72
    %s92 = sphi 0, %s94
    %s95 = sphi 0, %s92
    %s96 = sphi 0, %s95
    %s112 = sphi 0, %s96
  $region4: #{model2_forward.1} parent=0 // loop_header_branch
    %12 = sbr.rel (%p10) target = $region8
  $region5: #{model2_forward.1} parent=0 // loop_body
    %s14 = ssub.s32 %s9, 1
    %s15 = ssub.s32 %s9, 2
    %s16 = sadd.s32 %s9, 1
    %s17 = ssub.s32 %s9, %s16
    %p18 = scmp.eq.s32.totalorder %s17, 0
    %s20 = sadd.s32 %s19, 1
    %s21 = scalar_select %p18, %s19, %s20
    %p24 = pneg %p18
    %p25 = scmp.eq.s32.totalorder %s9, 1
    %p26 = por %p24, %p25
    %p27 = scmp.ne.s32.totalorder %s19, %s22
    %p28 = scmp.eq.s32.totalorder %s9, 0
    %p29 = por %p27, %p28
    %p30 = scmp.ne.s32.totalorder %s19, %s22
    %p31 = scmp.eq.s32.totalorder %s14, 1
    %p32 = por %p30, %p31
    %p33 = scmp.ne.s32.totalorder %s22, %s23
    %p34 = scmp.eq.s32.totalorder %s14, 0
    %p35 = por %p33, %p34
    %p36 = scmp.ne.s32.totalorder %s22, %s23
    %p37 = scmp.eq.s32.totalorder %s15, 1
    %p38 = por %p36, %p37
    %p40 = scmp.ne.s32.totalorder %s23, %s39
    %p41 = scmp.eq.s32.totalorder %s15, 0
    %p42 = por %p40, %p41
    %s43 = ssub.s32 %s9, %s16
    %p44 = scmp.eq.s32.totalorder %s43, 0
    %s46 = sadd.s32 %s45, 1
    %s47 = scalar_select %p44, %s45, %s46
    %p50 = pneg %p44
    %p51 = scmp.eq.s32.totalorder %s9, 1
    %p52 = por %p50, %p51
    %p53 = scmp.ne.s32.totalorder %s45, %s48
    %p54 = scmp.eq.s32.totalorder %s9, 0
    %p55 = por %p53, %p54
    %p56 = scmp.ne.s32.totalorder %s45, %s48
    %p57 = scmp.eq.s32.totalorder %s14, 1
    %p58 = por %p56, %p57
    %p59 = scmp.ne.s32.totalorder %s48, %s49
    %p60 = scmp.eq.s32.totalorder %s14, 0
    %p61 = por %p59, %p60
    %p62 = scmp.ne.s32.totalorder %s48, %s49
    %p63 = scmp.eq.s32.totalorder %s15, 1
    %p64 = por %p62, %p63
    %p66 = scmp.ne.s32.totalorder %s49, %s65
    %p67 = scmp.eq.s32.totalorder %s15, 0
    %p68 = por %p66, %p67
    %s70 = sadd.s32 %s69, 1
    %p73 = scmp.eq.s32.totalorder %s9, 1
    %p74 = scmp.ne.s32.totalorder %s69, %s71
    %p75 = scmp.eq.s32.totalorder %s9, 0
    %p76 = por %p74, %p75
    %p77 = scmp.ne.s32.totalorder %s69, %s71
    %p78 = scmp.eq.s32.totalorder %s14, 1
    %p79 = por %p77, %p78
    %p80 = scmp.ne.s32.totalorder %s71, %s72
    %p81 = scmp.eq.s32.totalorder %s14, 0
    %p82 = por %p80, %p81
    %p83 = scmp.ne.s32.totalorder %s71, %s72
    %p84 = scmp.eq.s32.totalorder %s15, 1
    %p85 = por %p83, %p84
    %p87 = scmp.ne.s32.totalorder %s72, %s86
    %p88 = scmp.eq.s32.totalorder %s15, 0
    %p89 = por %p87, %p88
    %s90 = ssub.s32 %s9, %s16
    %p91 = scmp.eq.s32.totalorder %s90, 0
    %s93 = sadd.s32 %s92, 1
    %s94 = scalar_select %p91, %s92, %s93
    %p97 = pneg %p91
    %p98 = scmp.eq.s32.totalorder %s9, 1
    %p99 = por %p97, %p98
    %p100 = scmp.ne.s32.totalorder %s92, %s95
    %p101 = scmp.eq.s32.totalorder %s9, 0
    %p102 = por %p100, %p101
    %p103 = scmp.ne.s32.totalorder %s92, %s95
    %p104 = scmp.eq.s32.totalorder %s14, 1
    %p105 = por %p103, %p104
    %p106 = scmp.ne.s32.totalorder %s95, %s96
    %p107 = scmp.eq.s32.totalorder %s14, 0
    %p108 = por %p106, %p107
    %p109 = scmp.ne.s32.totalorder %s95, %s96
    %p110 = scmp.eq.s32.totalorder %s15, 1
    %p111 = por %p109, %p110
    %p113 = scmp.ne.s32.totalorder %s96, %s112
    %p114 = scmp.eq.s32.totalorder %s15, 0
    %p115 = por %p113, %p114
    %p116 = scmp.le.s32.totalorder 1, %s9
    %p117 = scmp.lt.s32.totalorder %s9, 3
    %p118 = pnand %p116, %p117
    %p119 = pneg %p118
    // Predicated region
    $region9: #{model2_forward.1} parent=5 // pred_check
      _
    $region10: #{model2_forward.1} parent=5 // pred_check_branch
      %121 = sbr.rel (%p118) target = $region12
    $region11: #{model2_forward.1} parent=5 // pred_region
      %s122 = ssub.s32 %s9, 1
      // Predicated region
      $region13: #{model2_forward.1} parent=11 // pred_check
        %p123 = pneg %p82
      $region14: #{model2_forward.1} parent=11 // pred_check_branch
        %125 = sbr.rel (%p123) target = $region16
      $region15: #{model2_forward.1} parent=11 // pred_region
        _
      $region16: #{model2_forward.1} parent=11 // pred_fallthru
        _
    $region12: #{model2_forward.1} parent=5 // pred_fallthru
      _
    %p126 = scmp.lt.s32.totalorder %s9, 2
    // Predicated region
    $region17: #{model2_forward.1} parent=5 // pred_check
      %p127 = pneg %p126
    $region18: #{model2_forward.1} parent=5 // pred_check_branch
      %129 = sbr.rel (%p127) target = $region20
    $region19: #{model2_forward.1} parent=5 // pred_region
      // Predicated region
      $region21: #{model2_forward.1} parent=19 // pred_check
        %p130 = pneg %p29
      $region22: #{model2_forward.1} parent=19 // pred_check_branch
        %132 = sbr.rel (%p130) target = $region24
      $region23: #{model2_forward.1} parent=19 // pred_region
        %p133 = scmp.lt.s32.totalorder %s9, 1
        %s134 = scalar_select %p133, %s9, 1
        %s135 = smul.addr %s134, 8
        %s136 = scalar_lea.vmem %s0, %s135
      $region24: #{model2_forward.1} parent=19 // pred_fallthru
        _
      // Predicated region
      $region25: #{model2_forward.1} parent=19 // pred_check
        %p137 = pneg %p55
      $region26: #{model2_forward.1} parent=19 // pred_check_branch
        %139 = sbr.rel (%p137) target = $region28
      $region27: #{model2_forward.1} parent=19 // pred_region
        %p140 = scmp.lt.s32.totalorder %s9, 1
        %s141 = scalar_select %p140, %s9, 1
        %s142 = smul.addr %s141, 8
        %s143 = scalar_lea.vmem %s1, %s142
      $region28: #{model2_forward.1} parent=19 // pred_fallthru
        _
    $region20: #{model2_forward.1} parent=5 // pred_fallthru
      _
    %p144 = scmp.le.s32.totalorder 1, %s9
    %p145 = scmp.lt.s32.totalorder %s9, 3
    %p146 = pnand %p144, %p145
    %p147 = pneg %p146
    // Predicated region
    $region29: #{model2_forward.1} parent=5 // pred_check
      _
    $region30: #{model2_forward.1} parent=5 // pred_check_branch
      %149 = sbr.rel (%p146) target = $region32
    $region31: #{model2_forward.1} parent=5 // pred_region
      %s150 = ssub.s32 %s9, 1
      %p151 = scmp.lt.s32.totalorder %s14, 1
      %s152 = scalar_select %p151, %s14, 1
      %s153 = smul.addr %s152, 8
      %s154 = scalar_lea.vmem %s0, %s153
      %p155 = pneg %p35
      %p156 = pneg %p32
      %p157 = scmp.lt.s32.totalorder %s14, 1
      %s158 = scalar_select %p157, %s14, 1
      %s159 = smul.addr %s158, 8
      %s160 = scalar_lea.vmem %s1, %s159
      %p161 = pneg %p61
      %p162 = pneg %p58
      %p163 = pneg %p82
      %p164 = pneg %p79
      %p165 = pneg %p108
      %p166 = pneg %p105
      %p167 = scmp.lt.s32.totalorder %s14, 1
      %s168 = scalar_select %p167, %s14, 1
      %s169 = smul.addr %s168, 8
      %s170 = scalar_lea.vmem %s3, %s169
      %p171 = scmp.lt.s32.totalorder %s14, 1
      %s172 = scalar_select %p171, %s14, 1
      %s173 = smul.addr %s172, 8
      %s174 = scalar_lea.vmem %s0, %s173
      %p175 = scmp.lt.s32.totalorder %s14, 1
      %s176 = scalar_select %p175, %s14, 1
      %s177 = smul.addr %s176, 8
      %s178 = scalar_lea.vmem %s1, %s177
      %p179 = scmp.lt.s32.totalorder %s14, 1
      %s180 = scalar_select %p179, %s14, 1
      %s181 = smul.addr %s180, 8
      %s182 = scalar_lea.vmem %s3, %s181
      %v183 = vld [vmem:[%s174] sm:$0xff]
      %vm184 = vcmp.ne.s32.totalorder %v183, 4294967295
      %v185 = vsel %vm184, 1, 0
      %v186 = vcvt.s32.f32 %v185
      %v187 = vld [vmem:[%s178] sm:$0xff]
      %v188 = vsel %vm184, %v187, -1e+30
      %vm189 = vcmask 64512
      %v190 = vsel %vm189, %v188, -inf
      %191 = vmax.xlane.f32.xlu0 %v190
      %v192 = vpop.xlane.xlu0 %191
      %v193 = vsub.f32 %v188, %v192
      %v194 = vmul.f32 %v193, 1.442695
      %v195 = vpow.pop %v194
      %v196 = vmul.f32 %v195, %v186
      %v197 = vsel %vm189, %v196, 0.0
      %198 = vadd.xlane.f32.xlu0 %v197
      %v199 = vpop.xlane.xlu0 %198
      %v200 = vmax.f32 %v199, 1e-30
      %v201 = vrcp.pop %v200
      %v202 = vmul.f32 %v196, %v201
      %vm203 = vcmp.gt.s32.totalorder %v183, 0
      %v204 = vsel %vm203, %v183, 0
      %v205 = vlaneseq
      %v206 = vshrl.u32 %v205, 7
      %v207 = vsub.s32 0, %v206
      %v208 = vrot.slane %v204, %v207
      %210 = vbcast.lane.b32.xlu0 %v208, 256
      %v211 = vpop.permute.xlu0 %210
      %v212 = vlaneseq
      %v213 = vshrl.u32 %v212, 7
      %v214 = vsub.s32 1, %v213
      %v215 = vrot.slane %v204, %v214
      %217 = vbcast.lane.b32.xlu0 %v215, 256
      %v218 = vpop.permute.xlu0 %217
      %v219 = vlaneseq
      %v220 = vshrl.u32 %v219, 7
      %v221 = vsub.s32 2, %v220
      %v222 = vrot.slane %v204, %v221
      %224 = vbcast.lane.b32.xlu0 %v222, 256
      %v225 = vpop.permute.xlu0 %224
      %v226 = vlaneseq
      %v227 = vshrl.u32 %v226, 7
      %v228 = vsub.s32 3, %v227
      %v229 = vrot.slane %v204, %v228
      %231 = vbcast.lane.b32.xlu0 %v229, 256
      %v232 = vpop.permute.xlu0 %231
      %v233 = vlaneseq
      %v234 = vshrl.u32 %v233, 7
      %v235 = vsub.s32 4, %v234
      %v236 = vrot.slane %v204, %v235
      %238 = vbcast.lane.b32.xlu0 %v236, 256
      %v239 = vpop.permute.xlu0 %238
      %v240 = vlaneseq
      %v241 = vshrl.u32 %v240, 7
      %v242 = vsub.s32 5, %v241
      %v243 = vrot.slane %v204, %v242
      %245 = vbcast.lane.b32.xlu0 %v243, 256
      %v246 = vpop.permute.xlu0 %245
      %v247 = vlaneseq
      %v248 = vshrl.u32 %v247, 7
      %v249 = vsub.s32 6, %v248
      %v250 = vrot.slane %v204, %v249
      %252 = vbcast.lane.b32.xlu0 %v250, 256
      %v253 = vpop.permute.xlu0 %252
      %v254 = vlaneseq
      %v255 = vshrl.u32 %v254, 7
      %v256 = vsub.s32 7, %v255
      %v257 = vrot.slane %v204, %v256
      %259 = vbcast.lane.b32.xlu0 %v257, 256
      %v260 = vpop.permute.xlu0 %259
      %v261 = vlaneseq
      %v262 = vand.u32 %v261, 127
      %vm263 = vcmp.eq.s32.totalorder %v211, %v262
      %vm264 = vcmp.eq.s32.totalorder %v218, %v262
      %vm265 = vcmp.eq.s32.totalorder %v225, %v262
      %vm266 = vcmp.eq.s32.totalorder %v232, %v262
      %vm267 = vcmp.eq.s32.totalorder %v239, %v262
      %vm268 = vcmp.eq.s32.totalorder %v246, %v262
      %vm269 = vcmp.eq.s32.totalorder %v253, %v262
      %vm270 = vcmp.eq.s32.totalorder %v260, %v262
      %v271 = vsel %vm263, 1, 0
      %v272 = vsel %vm264, 1, 0
      %v273 = vsel %vm265, 1, 0
      %v274 = vsel %vm266, 1, 0
      %v275 = vsel %vm267, 1, 0
      %v276 = vsel %vm268, 1, 0
      %v277 = vsel %vm269, 1, 0
      %v278 = vsel %vm270, 1, 0
      %v279 = vcvt.s32.f32 %v271
      %v280 = vcvt.s32.f32 %v272
      %v281 = vcvt.s32.f32 %v273
      %v282 = vcvt.s32.f32 %v274
      %v283 = vcvt.s32.f32 %v275
      %v284 = vcvt.s32.f32 %v276
      %v285 = vcvt.s32.f32 %v277
      %v286 = vcvt.s32.f32 %v278
      %v287 = vlaneseq
      %v288 = vshrl.u32 %v287, 7
      %v289 = vsub.s32 0, %v288
      %v290 = vrot.slane %v202, %v289
      %292 = vbcast.lane.b32.xlu0 %v290, 256
      %v293 = vpop.permute.xlu0 %292
      %v294 = vlaneseq
      %v295 = vshrl.u32 %v294, 7
      %v296 = vsub.s32 1, %v295
      %v297 = vrot.slane %v202, %v296
      %299 = vbcast.lane.b32.xlu0 %v297, 256
      %v300 = vpop.permute.xlu0 %299
      %v301 = vlaneseq
      %v302 = vshrl.u32 %v301, 7
      %v303 = vsub.s32 2, %v302
      %v304 = vrot.slane %v202, %v303
      %306 = vbcast.lane.b32.xlu0 %v304, 256
      %v307 = vpop.permute.xlu0 %306
      %v308 = vlaneseq
      %v309 = vshrl.u32 %v308, 7
      %v310 = vsub.s32 3, %v309
      %v311 = vrot.slane %v202, %v310
      %313 = vbcast.lane.b32.xlu0 %v311, 256
      %v314 = vpop.permute.xlu0 %313
      %v315 = vlaneseq
      %v316 = vshrl.u32 %v315, 7
      %v317 = vsub.s32 4, %v316
      %v318 = vrot.slane %v202, %v317
      %320 = vbcast.lane.b32.xlu0 %v318, 256
      %v321 = vpop.permute.xlu0 %320
      %v322 = vlaneseq
      %v323 = vshrl.u32 %v322, 7
      %v324 = vsub.s32 5, %v323
      %v325 = vrot.slane %v202, %v324
      %327 = vbcast.lane.b32.xlu0 %v325, 256
      %v328 = vpop.permute.xlu0 %327
      %v329 = vlaneseq
      %v330 = vshrl.u32 %v329, 7
      %v331 = vsub.s32 6, %v330
      %v332 = vrot.slane %v202, %v331
      %334 = vbcast.lane.b32.xlu0 %v332, 256
      %v335 = vpop.permute.xlu0 %334
      %v336 = vlaneseq
      %v337 = vshrl.u32 %v336, 7
      %v338 = vsub.s32 7, %v337
      %v339 = vrot.slane %v202, %v338
      %341 = vbcast.lane.b32.xlu0 %v339, 256
      %v342 = vpop.permute.xlu0 %341
      %v343 = vmul.f32 %v279, %v293
      %v344 = vmul.f32 %v280, %v300
      %v345 = vmul.f32 %v281, %v307
      %v346 = vmul.f32 %v282, %v314
      %v347 = vmul.f32 %v283, %v321
      %v348 = vmul.f32 %v284, %v328
      %v349 = vmul.f32 %v285, %v335
      %v350 = vmul.f32 %v286, %v342
      %vm351 = vcmask 261120
      %v352 = vsel %vm351, %v343, 0.0
      %v353 = vrot.slane %v352, 4
      %v354 = vadd.f32 %v352, %v353
      %v355 = vrot.slane %v354, 2
      %v356 = vadd.f32 %v354, %v355
      %v357 = vrot.slane %v356, 1
      %v358 = vadd.f32 %v356, %v357
      %v359 = vsel %vm351, %v344, 0.0
      %v360 = vrot.slane %v359, 4
      %v361 = vadd.f32 %v359, %v360
      %v362 = vrot.slane %v361, 2
      %v363 = vadd.f32 %v361, %v362
      %v364 = vrot.slane %v363, 1
      %v365 = vadd.f32 %v363, %v364
      %v366 = vsel %vm351, %v345, 0.0
      %v367 = vrot.slane %v366, 4
      %v368 = vadd.f32 %v366, %v367
      %v369 = vrot.slane %v368, 2
      %v370 = vadd.f32 %v368, %v369
      %v371 = vrot.slane %v370, 1
      %v372 = vadd.f32 %v370, %v371
      %v373 = vsel %vm351, %v346, 0.0
      %v374 = vrot.slane %v373, 4
      %v375 = vadd.f32 %v373, %v374
      %v376 = vrot.slane %v375, 2
      %v377 = vadd.f32 %v375, %v376
      %v378 = vrot.slane %v377, 1
      %v379 = vadd.f32 %v377, %v378
      %v380 = vsel %vm351, %v347, 0.0
      %v381 = vrot.slane %v380, 4
      %v382 = vadd.f32 %v380, %v381
      %v383 = vrot.slane %v382, 2
      %v384 = vadd.f32 %v382, %v383
      %v385 = vrot.slane %v384, 1
      %v386 = vadd.f32 %v384, %v385
      %v387 = vsel %vm351, %v348, 0.0
      %v388 = vrot.slane %v387, 4
      %v389 = vadd.f32 %v387, %v388
      %v390 = vrot.slane %v389, 2
      %v391 = vadd.f32 %v389, %v390
      %v392 = vrot.slane %v391, 1
      %v393 = vadd.f32 %v391, %v392
      %v394 = vsel %vm351, %v349, 0.0
      %v395 = vrot.slane %v394, 4
      %v396 = vadd.f32 %v394, %v395
      %v397 = vrot.slane %v396, 2
      %v398 = vadd.f32 %v396, %v397
      %v399 = vrot.slane %v398, 1
      %v400 = vadd.f32 %v398, %v399
      %v401 = vsel %vm351, %v350, 0.0
      %v402 = vrot.slane %v401, 4
      %v403 = vadd.f32 %v401, %v402
      %v404 = vrot.slane %v403, 2
      %v405 = vadd.f32 %v403, %v404
      %v406 = vrot.slane %v405, 1
      %v407 = vadd.f32 %v405, %v406
      %v408 = vld [vmem:[%s2] sm:$0xff]
      %v409 = vld [vmem:[%s2 + $0x8] sm:$0xff]
      %v410 = vld [vmem:[%s2 + $0x10] sm:$0xff]
      %v411 = vld [vmem:[%s2 + $0x18] sm:$0xff]
      %vm420 = vcmask 1041409
      %v421 = vsel %vm420, %v365, %v358
      %vm422 = vcmask 1042434
      %v423 = vsel %vm422, %v372, %v421
      %vm424 = vcmask 1043459
      %v425 = vsel %vm424, %v379, %v423
      %vm426 = vcmask 1044484
      %v427 = vsel %vm426, %v386, %v425
      %vm428 = vcmask 1045509
      %v429 = vsel %vm428, %v393, %v427
      %vm430 = vcmask 1046534
      %v431 = vsel %vm430, %v400, %v429
      %vm432 = vcmask 1047559
      %v433 = vsel %vm432, %v407, %v431
      %v434 = vsel %vm351, %v433, 0
      %436 = vmatprep.subr.mxu0 0.0
      %437 = vmatpush1.msra.mxu0 %v408
      %438 = vmatprep.subr.mxu0 0.0
      %439 = vmatpush1.msra.mxu0 %v409
      %440 = vmatprep.subr.mxu0 0.0
      %441 = vmatpush1.msra.mxu0 %v410
      %442 = vmatprep.subr.mxu0 0.0
      %443 = vmatpush1.msra.mxu0 %v411
      %444 = vmatprep.subr.mxu0 0.0
      %445 = vmatpush1.msra.mxu0 0.0
      %446 = vmatprep.subr.mxu0 0.0
      %447 = vmatpush1.msra.mxu0 0.0
      %448 = vmatprep.subr.mxu0 0.0
      %449 = vmatpush1.msra.mxu0 0.0
      %450 = vmatprep.subr.mxu0 0.0
      %451 = vmatpush1.msra.mxu0 0.0
      %452 = vmatprep.subr.mxu0 0.0
      %453 = vmatpush1.msra.mxu0 0.0
      %454 = vmatprep.subr.mxu0 0.0
      %455 = vmatpush1.msra.mxu0 0.0
      %456 = vmatprep.subr.mxu0 0.0
      %457 = vmatpush1.msra.mxu0 0.0
      %458 = vmatprep.subr.mxu0 0.0
      %459 = vmatpush1.msra.mxu0 0.0
      %460 = vmatprep.subr.mxu0 0.0
      %461 = vmatpush1.msra.mxu0 0.0
      %462 = vmatprep.subr.mxu0 0.0
      %463 = vmatpush1.msra.mxu0 0.0
      %464 = vmatprep.subr.mxu0 0.0
      %465 = vmatpush1.msra.mxu0 0.0
      %466 = vmatprep.subr.mxu0 0.0
      %467 = vmatpush1.msra.mxu0 0.0
      %468 = vmatprep.subr.mxu0 0.0
      %469 = vmatpush1.msra.mxu0 0.0
      %470 = vmatprep.subr.mxu0 0.0
      %471 = vmatpush1.msra.mxu0 0.0
      %472 = vmatprep.subr.mxu0 0.0
      %473 = vmatpush1.msra.mxu0 0.0
      %474 = vmatprep.subr.mxu0 0.0
      %475 = vmatpush1.msra.mxu0 0.0
      %476 = vmatprep.subr.mxu0 0.0
      %477 = vmatpush1.msra.mxu0 0.0
      %478 = vmatprep.subr.mxu0 0.0
      %479 = vmatpush1.msra.mxu0 0.0
      %480 = vmatprep.subr.mxu0 0.0
      %481 = vmatpush1.msra.mxu0 0.0
      %482 = vmatprep.subr.mxu0 0.0
      %483 = vmatpush1.msra.mxu0 0.0
      %484 = vmatprep.subr.mxu0 0.0
      %485 = vmatpush1.msra.mxu0 0.0
      %486 = vmatprep.subr.mxu0 0.0
      %487 = vmatpush1.msra.mxu0 0.0
      %488 = vmatprep.subr.mxu0 0.0
      %489 = vmatpush1.msra.mxu0 0.0
      %490 = vmatprep.subr.mxu0 0.0
      %491 = vmatpush1.msra.mxu0 0.0
      %492 = vmatprep.subr.mxu0 0.0
      %493 = vmatpush1.msra.mxu0 0.0
      %494 = vmatprep.subr.mxu0 0.0
      %495 = vmatpush1.msra.mxu0 0.0
      %496 = vmatprep.subr.mxu0 0.0
      %497 = vmatpush1.msra.mxu0 0.0
      %498 = vmatprep.subr.mxu0 0.0
      %499 = vmatpush1.msra.mxu0 0.0
      %500 = vmatprep.mubr.f32.mxu0 0.0
      %501 = vmatmul.mubr.f32.gmra.mrb[0].mxu0 %v434
      %v502 = vpop.f32.mrb[0].mxu0
      %v503 = vadd.f32 0.0, %v502
      %v504 = vpop.f32.mrb[0].mxu0
      %505 = vdwg.mxu0
      %506 = vst [vmem:[%s182] sm:$0xff] %v503
      %p507 = scmp.lt.s32.totalorder %s14, 1
      %s508 = scalar_select %p507, %s14, 1
      %s509 = smul.addr %s508, 8
      %s510 = scalar_lea.vmem %s3, %s509
      // Predicated region
      $region33: #{model2_forward.1} parent=31 // pred_check
        %p511 = pneg %p105
      $region34: #{model2_forward.1} parent=31 // pred_check_branch
        %513 = sbr.rel (%p511) target = $region36
      $region35: #{model2_forward.1} parent=31 // pred_region
        _
      $region36: #{model2_forward.1} parent=31 // pred_fallthru
        _
    $region32: #{model2_forward.1} parent=5 // pred_fallthru
      _
    %p514 = scmp.le.s32.totalorder 2, %s9
    // Predicated region
    $region37: #{model2_forward.1} parent=5 // pred_check
      %p515 = pneg %p514
    $region38: #{model2_forward.1} parent=5 // pred_check_branch
      %517 = sbr.rel (%p515) target = $region40
    $region39: #{model2_forward.1} parent=5 // pred_region
      %s518 = ssub.s32 %s9, 2
      // Predicated region
      $region41: #{model2_forward.1} parent=39 // pred_check
        %p519 = pneg %p111
      $region42: #{model2_forward.1} parent=39 // pred_check_branch
        %521 = sbr.rel (%p519) target = $region44
      $region43: #{model2_forward.1} parent=39 // pred_region
        %p522 = scmp.lt.s32.totalorder %s15, 1
        %s523 = scalar_select %p522, %s15, 1
        %s524 = smul.addr %s523, 8
        %s525 = scalar_lea.vmem %s3, %s524
      $region44: #{model2_forward.1} parent=39 // pred_fallthru
        _
    $region40: #{model2_forward.1} parent=5 // pred_fallthru
      _
  $region6: #{model2_forward.1} parent=0 // loop_footer
    %s13 = sadd.s32 1, %s9
  $region7: #{model2_forward.1} parent=0 // loop_footer_branch
    %8 = sbr.rel target = $region3
  $region8: #{model2_forward.1} parent=0 // loop_exit
    _

</llo_original>
